<compile_context>
chip_gen: v6e
topology: v6e:2x2x1
jax: 0.10.0
libtpu: 0.0.40
codegen_flags: <defaults>
</compile_context>

<pallas_src>
import functools

import jax
import jax.numpy as jnp
from jax import lax
from jax.experimental import pallas as pl
from jax.experimental.pallas import tpu as pltpu


# ----------------------------------------------------------------------------
# Fused kernel: transposed linear + leaky_relu + 2-class softmax (as sigmoid)
# ----------------------------------------------------------------------------
def _mlp1_kernel(x_ref, w_ref, b_ref, o_ref, *, negative_slope):
    # logits^T (2, tm): contract n_mlp of W (2, n_mlp) with n_mlp of x (tm, n_mlp).
    logits_t = lax.dot_general(
        w_ref[...], x_ref[...],
        dimension_numbers=(((1,), (1,)), ((), ())),
        preferred_element_type=jnp.float32,
    )
    # Per-class bias from SMEM scalars, then leaky_relu (PyTorch default slope).
    a0 = logits_t[0:1, :] + b_ref[0]
    a1 = logits_t[1:2, :] + b_ref[1]
    a0 = jnp.where(a0 >= 0.0, a0, negative_slope * a0)
    a1 = jnp.where(a1 >= 0.0, a1, negative_slope * a1)
    # softmax([a0, a1]) == [sigmoid(a0 - a1), sigmoid(a1 - a0)]:
    #   p0 = 1 / (1 + exp(a1 - a0)); p1 = 1 - p0.
    # Saturates cleanly (exp->inf gives p0 = 0); no cross-lane reductions.
    p0 = pl.reciprocal(1.0 + jnp.exp(a1 - a0), approx=False)
    p1 = 1.0 - p0
    o_ref[...] = jnp.concatenate([p0, p1], axis=0).astype(o_ref.dtype)


# ----------------------------------------------------------------------------
# Wrapper: row-tiled pallas_call (PyTorch-native parameter layouts)
# ----------------------------------------------------------------------------
def mlp1_forward(x, weight, bias, *, block_rows=4096, negative_slope=0.01,
                 transposed_output=False):
    """softmax(leaky_relu(x @ weight.T + bias), axis=1).

    x:      (N, n_mlp)
    weight: (2, n_mlp)   -- PyTorch Linear layout (out, in)
    bias:   (2,)         -- PyTorch Linear layout
    Returns (N, 2), or (2, N) when transposed_output=True (lane-dense slab for
    a fused consumer).
    """
    n, n_mlp = x.shape
    n_out, n_mlp_w = weight.shape
    if n_out != 2 or n_mlp_w != n_mlp:
        raise ValueError(f"weight must be (2, {n_mlp}), got {weight.shape}")
    bias = jnp.asarray(bias, jnp.float32).reshape(n_out)

    # Row tile: full array if it fits in one block, else a multiple of 128
    # (lane-dense (2, tm) output block + sublane-aligned (tm, n_mlp) x block).
    if n <= block_rows:
        tm = n
    else:
        tm = min(max(128, (block_rows // 128) * 128), n)
    grid = (pl.cdiv(n, tm),)

    cost = pl.CostEstimate(
        flops=2 * n * n_mlp * n_out,
        transcendentals=n,  # one exp per row
        bytes_accessed=(n * n_mlp * x.dtype.itemsize
                        + n_out * n_mlp * weight.dtype.itemsize
                        + n * n_out * 4),
    )

    out_t = pl.pallas_call(
        functools.partial(_mlp1_kernel, negative_slope=negative_slope),
        grid=grid,
        in_specs=[
            # x: row tile, double-buffered HBM->VMEM stream
            pl.BlockSpec((tm, n_mlp), lambda i: (i, 0)),
            # W: VMEM-resident across all grid steps (constant index_map)
            pl.BlockSpec((n_out, n_mlp), lambda i: (0, 0)),
            # bias: two scalars in SMEM
            pl.BlockSpec(memory_space=pltpu.MemorySpace.SMEM),
        ],
        out_specs=pl.BlockSpec((n_out, tm), lambda i: (0, i)),
        out_shape=jax.ShapeDtypeStruct((n_out, n), jnp.float32),
        compiler_params=pltpu.CompilerParams(
            dimension_semantics=("parallel",)),
        cost_estimate=cost,
    )(x, weight, bias)

    if transposed_output:
        return out_t
    # Module contract is (N, 2); consumers that can eat (2, N) should use
    # transposed_output=True and skip this lane-sparse transpose.
    return out_t.T


# ----------------------------------------------------------------------------
# Pure-JAX reference (matches the PyTorch module)
# ----------------------------------------------------------------------------
def mlp1_reference(x, weight, bias, negative_slope=0.01):
    logits = x @ weight.T + bias.reshape(1, -1)
    act = jnp.where(logits >= 0.0, logits, negative_slope * logits)
    return jax.nn.softmax(act, axis=1)


# ----------------------------------------------------------------------------
# Demo
# ----------------------------------------------------------------------------
if __name__ == "__main__":
    n_mlp, n_out = 64, 2

    key = jax.random.PRNGKey(0)
    kx1, kx2, kw, kb = jax.random.split(key, 4)

    # PyTorch-Linear-style init: U(-1/sqrt(fan_in), 1/sqrt(fan_in)),
    # parameters in native PyTorch layouts.
    bound = 1.0 / jnp.sqrt(jnp.float32(n_mlp))
    weight = jax.random.uniform(kw, (n_out, n_mlp), jnp.float32, -bound, bound)
    bias = jax.random.uniform(kb, (n_out,), jnp.float32, -bound, bound)

    # Case 1: evenly divisible multi-tile grid (exercises pipelining / 2 steps).
    n1 = 512
    x1 = jax.random.normal(kx1, (n1, n_mlp), jnp.float32)
    out1 = jax.block_until_ready(mlp1_forward(x1, weight, bias, block_rows=256))
    ref1 = mlp1_reference(x1, weight, bias)
    assert out1.shape == (n1, n_out)
    assert bool(jnp.all(jnp.isfinite(out1)))
    assert bool(jnp.allclose(jnp.sum(out1, axis=1), 1.0, atol=1e-5))
    assert bool(jnp.allclose(out1, ref1, rtol=1e-5, atol=1e-6))

    # Case 2: ragged tail (N not a multiple of the row tile).
    n2 = 200
    x2 = jax.random.normal(kx2, (n2, n_mlp), jnp.float32)
    out2 = jax.block_until_ready(mlp1_forward(x2, weight, bias, block_rows=128))
    ref2 = mlp1_reference(x2, weight, bias)
    assert out2.shape == (n2, n_out)
    assert bool(jnp.all(jnp.isfinite(out2)))
    assert bool(jnp.allclose(out2, ref2, rtol=1e-5, atol=1e-6))

    print("KERNEL_OK")
</pallas_src>

<mosaic_0001>
module attributes {stable_mosaic.version = 11 : i64} {
  func.func @_mlp1_kernel(%arg0: i32, %arg1: memref<256x64xf32, #tpu.memory_space<vmem>>, %arg2: memref<2x64xf32, #tpu.memory_space<vmem>>, %arg3: memref<2xf32, #tpu.memory_space<smem>>, %arg4: memref<2x256xf32, #tpu.memory_space<vmem>>) attributes {dimension_semantics = [#tpu.dimension_semantics<parallel>], iteration_bounds = array<i64: 2>, scalar_prefetch = 0 : i64, scratch_operands = 0 : i64, tpu.core_type = #tpu.core_type<tc>, window_params = [{transform_indices = @transform_0, window_bounds = array<i64: 256, 64>}, {pipeline_mode = #tpu.pipeline_mode<synchronous>, transform_indices = @transform_1, window_bounds = array<i64: 2, 64>}, {transform_indices = @transform_2, window_bounds = array<i64: 2>}, {transform_indices = @transform_3, window_bounds = array<i64: 2, 256>}]} {
    %c0 = arith.constant 0 : index
    %c0_0 = arith.constant 0 : index
    %0 = vector.load %arg2[%c0, %c0_0] : memref<2x64xf32, #tpu.memory_space<vmem>>, vector<2x64xf32>
    %c0_1 = arith.constant 0 : index
    %c0_2 = arith.constant 0 : index
    %1 = vector.load %arg1[%c0_1, %c0_2] : memref<256x64xf32, #tpu.memory_space<vmem>>, vector<256x64xf32>
    %cst = arith.constant dense<0.000000e+00> : vector<2x256xf32>
    %2 = tpu.matmul %0, %1, %cst {dimension_numbers = #tpu.dot_dimension_numbers<[1], [1], [0], [0], [0, 0, 1, 0], [], []>} : vector<2x64xf32>, vector<256x64xf32>, vector<2x256xf32> -> vector<2x256xf32>
    %3 = vector.extract_strided_slice %2 {offsets = [0, 0], sizes = [1, 256], strides = [1, 1]} : vector<2x256xf32> to vector<1x256xf32>
    %c0_3 = arith.constant 0 : index
    %4 = memref.load %arg3[%c0_3] : memref<2xf32, #tpu.memory_space<smem>>
    %5 = vector.broadcast %4 : f32 to vector<1x256xf32>
    %6 = arith.addf %3, %5 : vector<1x256xf32>
    %7 = vector.extract_strided_slice %2 {offsets = [1, 0], sizes = [1, 256], strides = [1, 1]} : vector<2x256xf32> to vector<1x256xf32>
    %c1 = arith.constant 1 : index
    %8 = memref.load %arg3[%c1] : memref<2xf32, #tpu.memory_space<smem>>
    %9 = vector.broadcast %8 : f32 to vector<1x256xf32>
    %10 = arith.addf %7, %9 : vector<1x256xf32>
    %cst_4 = arith.constant 0.000000e+00 : f32
    %11 = vector.broadcast %cst_4 : f32 to vector<1x256xf32>
    %12 = arith.cmpf oge, %6, %11 : vector<1x256xf32>
    %cst_5 = arith.constant 0.00999999977 : f32
    %13 = vector.broadcast %cst_5 : f32 to vector<1x256xf32>
    %14 = arith.mulf %13, %6 : vector<1x256xf32>
    %15 = arith.select %12, %6, %14 : vector<1x256xi1>, vector<1x256xf32>
    %cst_6 = arith.constant 0.000000e+00 : f32
    %16 = vector.broadcast %cst_6 : f32 to vector<1x256xf32>
    %17 = arith.cmpf oge, %10, %16 : vector<1x256xf32>
    %cst_7 = arith.constant 0.00999999977 : f32
    %18 = vector.broadcast %cst_7 : f32 to vector<1x256xf32>
    %19 = arith.mulf %18, %10 : vector<1x256xf32>
    %20 = arith.select %17, %10, %19 : vector<1x256xi1>, vector<1x256xf32>
    %21 = arith.subf %20, %15 : vector<1x256xf32>
    %22 = math.exp %21 : vector<1x256xf32>
    %cst_8 = arith.constant 1.000000e+00 : f32
    %23 = vector.broadcast %cst_8 : f32 to vector<1x256xf32>
    %24 = arith.addf %23, %22 : vector<1x256xf32>
    %25 = tpu.reciprocal %24 : vector<1x256xf32> -> vector<1x256xf32>
    %cst_9 = arith.constant 1.000000e+00 : f32
    %26 = vector.broadcast %cst_9 : f32 to vector<1x256xf32>
    %27 = arith.subf %26, %25 : vector<1x256xf32>
    %28 = tpu.concatenate %25, %27 in 0 : vector<1x256xf32>, vector<1x256xf32> -> vector<2x256xf32>
    %c0_10 = arith.constant 0 : index
    %c0_11 = arith.constant 0 : index
    %29 = vector.load %arg4[%c0_10, %c0_11] : memref<2x256xf32, #tpu.memory_space<vmem>>, vector<2x256xf32>
    tpu.vector_store %arg4[%c0_10, %c0_11], %28 {strides = array<i32>} : memref<2x256xf32, #tpu.memory_space<vmem>>, vector<2x256xf32>,
    return
  }
  func.func @transform_0(%arg0: i32) -> (i32, i32) {
    %c0_i32 = arith.constant 0 : i32
    %c0_i32_0 = arith.constant 0 : i32
    return %arg0, %c0_i32 : i32, i32
  }
  func.func @transform_1(%arg0: i32) -> (i32, i32) {
    %c0_i32 = arith.constant 0 : i32
    %c0_i32_0 = arith.constant 0 : i32
    %c0_i32_1 = arith.constant 0 : i32
    return %c0_i32, %c0_i32_0 : i32, i32
  }
  func.func @transform_2(%arg0: i32) -> i32 {
    %c0_i32 = arith.constant 0 : i32
    %c0_i32_0 = arith.constant 0 : i32
    return %c0_i32 : i32
  }
  func.func @transform_3(%arg0: i32) -> (i32, i32) {
    %c0_i32 = arith.constant 0 : i32
    %c0_i32_0 = arith.constant 0 : i32
    return %c0_i32, %arg0 : i32, i32
  }
}

</mosaic_0001>

<llo_original>
// kernel: tpu_custom_call.1
$region0: #{tpu_custom_call.1}
  #allocation0 [shape = 'u32[]', space=smem, size = 0x4, offset = 0x4, fixed_abs, tag = 'smem constant byte address 0x4 - core index']
  #allocation1 [shape = 'u32[144,128]{1,0:T(1,128)}', space=vmem, size = 0x12000, scoped, tag = 'internal scratch']
  %s0 = inlined_call_operand.vmem [shape: f32[512,64], index: 0, kind: input, shape index: {}]
  %s1 = inlined_call_operand.vmem [shape: f32[2,64], index: 1, kind: input, shape index: {}]
  %s2 = inlined_call_operand.vmem [shape: f32[2], index: 2, kind: input, shape index: {}]
  %s3 = inlined_call_operand.hbm [shape: f32[2,512], index: 3, kind: output, shape index: {}]
  %s4 = sld [smem:[#allocation0]]
  $region49: #{tpu_custom_call.1} parent=0
    _
  %s6 = ssub.s32 1, %s4
  %s7 = scalar_select 0, %s6, %s4
  $region1: #{tpu_custom_call.1} parent=0
    #allocation2 [shape = 'u8[512]{0}', space=smem, size = 0x200, scoped, tag = 'input window, operand 2, single buffered']
    #allocation3 [shape = 's32[2]{0}', space=sflag, size = 0x8, scoped, tag = 'scoped memory for tpu_custom_call.1']
    #allocation4 [shape = 's32[2]{0}', space=sflag, size = 0x8, scoped, tag = 'scoped memory for tpu_custom_call.1']
    #allocation5 [shape = 'u8[4096]{0}', space=vmem, size = 0x1000, scoped, tag = 'output window, operand 0']
    %8 = vsyncpa [#allocation4], 0
    %9 = vsyncpa [#allocation3], 0
    %s10 = scalar_lea.sflag [#allocation3], 1
    %11 = vsyncpa %s10, 0
    loop: start=0, step=1, limit=4
    $region2: #{tpu_custom_call.1} parent=1 // loop_pre_header
      _
    $region3: #{tpu_custom_call.1} parent=1 // loop_header
      %s13 = sphi 0, %s17
      %p14 = scmp.ge.s32.totalorder %s13, 4
      %s23 = sphi 0, %s25
      %s26 = sphi 0, %s23
      %s27 = sphi 0, %s26
      %s43 = sphi 0, %s27
      %s47 = sphi 0, %s47
      %s49 = sphi 0, %s47
      %s50 = sphi 0, %s49
      %s64 = sphi 0, %s50
      %s68 = sphi 0, %s68
      %s70 = sphi 0, %s68
      %s71 = sphi 0, %s70
      %s85 = sphi 0, %s71
      %s91 = sphi 0, %s93
      %s94 = sphi 0, %s91
      %s95 = sphi 0, %s94
      %s111 = sphi 0, %s95
    $region4: #{tpu_custom_call.1} parent=1 // loop_header_branch
      %16 = sbr.rel (%p14) target = $region8
    $region5: #{tpu_custom_call.1} parent=1 // loop_body
      %s18 = ssub.s32 %s13, 1
      %s19 = ssub.s32 %s13, 2
      %s20 = sadd.s32 %s13, 1
      %s21 = ssub.s32 %s13, %s20
      %p22 = scmp.eq.s32.totalorder %s21, 0
      %s24 = sadd.s32 %s23, 1
      %s25 = scalar_select %p22, %s23, %s24
      %p28 = pneg %p22
      %p29 = scmp.eq.s32.totalorder %s13, 1
      %p30 = por %p28, %p29
      %p31 = scmp.ne.s32.totalorder %s23, %s26
      %p32 = scmp.eq.s32.totalorder %s13, 0
      %p33 = por %p31, %p32
      %p34 = scmp.ne.s32.totalorder %s23, %s26
      %p35 = scmp.eq.s32.totalorder %s18, 1
      %p36 = por %p34, %p35
      %p37 = scmp.ne.s32.totalorder %s26, %s27
      %p38 = scmp.eq.s32.totalorder %s18, 0
      %p39 = por %p37, %p38
      %p40 = scmp.ne.s32.totalorder %s26, %s27
      %p41 = scmp.eq.s32.totalorder %s19, 1
      %p42 = por %p40, %p41
      %p44 = scmp.ne.s32.totalorder %s27, %s43
      %p45 = scmp.eq.s32.totalorder %s19, 0
      %p46 = por %p44, %p45
      %s48 = sadd.s32 %s47, 1
      %p51 = scmp.eq.s32.totalorder %s13, 1
      %p52 = scmp.ne.s32.totalorder %s47, %s49
      %p53 = scmp.eq.s32.totalorder %s13, 0
      %p54 = por %p52, %p53
      %p55 = scmp.ne.s32.totalorder %s47, %s49
      %p56 = scmp.eq.s32.totalorder %s18, 1
      %p57 = por %p55, %p56
      %p58 = scmp.ne.s32.totalorder %s49, %s50
      %p59 = scmp.eq.s32.totalorder %s18, 0
      %p60 = por %p58, %p59
      %p61 = scmp.ne.s32.totalorder %s49, %s50
      %p62 = scmp.eq.s32.totalorder %s19, 1
      %p63 = por %p61, %p62
      %p65 = scmp.ne.s32.totalorder %s50, %s64
      %p66 = scmp.eq.s32.totalorder %s19, 0
      %p67 = por %p65, %p66
      %s69 = sadd.s32 %s68, 1
      %p72 = scmp.eq.s32.totalorder %s13, 1
      %p73 = scmp.ne.s32.totalorder %s68, %s70
      %p74 = scmp.eq.s32.totalorder %s13, 0
      %p75 = por %p73, %p74
      %p76 = scmp.ne.s32.totalorder %s68, %s70
      %p77 = scmp.eq.s32.totalorder %s18, 1
      %p78 = por %p76, %p77
      %p79 = scmp.ne.s32.totalorder %s70, %s71
      %p80 = scmp.eq.s32.totalorder %s18, 0
      %p81 = por %p79, %p80
      %p82 = scmp.ne.s32.totalorder %s70, %s71
      %p83 = scmp.eq.s32.totalorder %s19, 1
      %p84 = por %p82, %p83
      %p86 = scmp.ne.s32.totalorder %s71, %s85
      %p87 = scmp.eq.s32.totalorder %s19, 0
      %p88 = por %p86, %p87
      %s89 = ssub.s32 %s13, %s20
      %p90 = scmp.eq.s32.totalorder %s89, 0
      %s92 = sadd.s32 %s91, 1
      %s93 = scalar_select %p90, %s91, %s92
      %p96 = pneg %p90
      %p97 = scmp.eq.s32.totalorder %s13, 1
      %p98 = por %p96, %p97
      %p99 = scmp.ne.s32.totalorder %s91, %s94
      %p100 = scmp.eq.s32.totalorder %s13, 0
      %p101 = por %p99, %p100
      %p102 = scmp.ne.s32.totalorder %s91, %s94
      %p103 = scmp.eq.s32.totalorder %s18, 1
      %p104 = por %p102, %p103
      %p105 = scmp.ne.s32.totalorder %s94, %s95
      %p106 = scmp.eq.s32.totalorder %s18, 0
      %p107 = por %p105, %p106
      %p108 = scmp.ne.s32.totalorder %s94, %s95
      %p109 = scmp.eq.s32.totalorder %s19, 1
      %p110 = por %p108, %p109
      %p112 = scmp.ne.s32.totalorder %s95, %s111
      %p113 = scmp.eq.s32.totalorder %s19, 0
      %p114 = por %p112, %p113
      %p115 = scmp.le.s32.totalorder 1, %s13
      %p116 = scmp.lt.s32.totalorder %s13, 3
      %p117 = pnand %p115, %p116
      %p118 = pneg %p117
      // Predicated region
      $region9: #{tpu_custom_call.1} parent=5 // pred_check
        _
      $region10: #{tpu_custom_call.1} parent=5 // pred_check_branch
        %120 = sbr.rel (%p117) target = $region12
      $region11: #{tpu_custom_call.1} parent=5 // pred_region
        %s121 = ssub.s32 %s13, 1
        // Predicated region
        $region13: #{tpu_custom_call.1} parent=11 // pred_check
          %p122 = pneg %p60
        $region14: #{tpu_custom_call.1} parent=11 // pred_check_branch
          %124 = sbr.rel (%p122) target = $region16
        $region15: #{tpu_custom_call.1} parent=11 // pred_region
          _
        $region16: #{tpu_custom_call.1} parent=11 // pred_fallthru
          _
        // Predicated region
        $region17: #{tpu_custom_call.1} parent=11 // pred_check
          %p125 = pneg %p81
        $region18: #{tpu_custom_call.1} parent=11 // pred_check_branch
          %127 = sbr.rel (%p125) target = $region20
        $region19: #{tpu_custom_call.1} parent=11 // pred_region
          %s129 = ssub.s32 16, 16
          %130 = vsyncadd [#allocation4], %s129
          %s132 = sshll.u32 %s2, 4
          %s133 = int_to_ptr.vmem [resolvable:$true] %s132
          %135 = dma.vmem_to_smem %s133, 16, [#allocation2], [#allocation4]
        $region20: #{tpu_custom_call.1} parent=11 // pred_fallthru
          _
      $region12: #{tpu_custom_call.1} parent=5 // pred_fallthru
        _
      %p136 = scmp.lt.s32.totalorder %s13, 2
      // Predicated region
      $region21: #{tpu_custom_call.1} parent=5 // pred_check
        %p137 = pneg %p136
      $region22: #{tpu_custom_call.1} parent=5 // pred_check_branch
        %139 = sbr.rel (%p137) target = $region24
      $region23: #{tpu_custom_call.1} parent=5 // pred_region
        // Predicated region
        $region25: #{tpu_custom_call.1} parent=23 // pred_check
          %p140 = pneg %p33
        $region26: #{tpu_custom_call.1} parent=23 // pred_check_branch
          %142 = sbr.rel (%p140) target = $region28
        $region27: #{tpu_custom_call.1} parent=23 // pred_region
          %s143 = smul.u32 32, %s13
          %p144 = scmp.lt.s32.totalorder %s143, 63
          %s145 = scalar_select %p144, %s143, 63
          %s146 = smul.addr %s145, 8
          %s147 = scalar_lea.vmem %s0, %s146
          %s148 = smul.u32 32, %s13
        $region28: #{tpu_custom_call.1} parent=23 // pred_fallthru
          _
      $region24: #{tpu_custom_call.1} parent=5 // pred_fallthru
        _
      %p149 = scmp.le.s32.totalorder 1, %s13
      %p150 = scmp.lt.s32.totalorder %s13, 3
      %p151 = pnand %p149, %p150
      %p152 = pneg %p151
      // Predicated region
      $region29: #{tpu_custom_call.1} parent=5 // pred_check
        _
      $region30: #{tpu_custom_call.1} parent=5 // pred_check_branch
        %154 = sbr.rel (%p151) target = $region32
      $region31: #{tpu_custom_call.1} parent=5 // pred_region
        %s155 = ssub.s32 %s13, 1
        // Predicated region
        $region33: #{tpu_custom_call.1} parent=31 // pred_check
          %p156 = pneg %p81
        $region34: #{tpu_custom_call.1} parent=31 // pred_check_branch
          %158 = sbr.rel (%p156) target = $region36
        $region35: #{tpu_custom_call.1} parent=31 // pred_region
          %159 = dma.done [#allocation4], 16
        $region36: #{tpu_custom_call.1} parent=31 // pred_fallthru
          _
        %160 = sfence
        %s161 = smul.u32 32, %s18
        %p162 = scmp.lt.s32.totalorder %s161, 63
        %s163 = scalar_select %p162, %s161, 63
        %s164 = smul.addr %s163, 8
        %s165 = scalar_lea.vmem %s0, %s164
        %p166 = pneg %p39
        %p167 = pneg %p36
        %p168 = pneg %p60
        %p169 = pneg %p57
        %p170 = pneg %p81
        %p171 = pneg %p78
        %p172 = pneg %p107
        %p173 = pneg %p104
        %s174 = sand.u32 %s94, 1
        %s175 = scalar_lea.sflag [#allocation3], %s174
        %s176 = sand.u32 %s94, 1
        %s177 = smul.addr %s176, 4
        %s178 = scalar_lea.vmem [#allocation5], %s177
        %s179 = smul.u32 32, %s18
        %p180 = scmp.lt.s32.totalorder %s179, 63
        %s181 = scalar_select %p180, %s179, 63
        %s182 = smul.addr %s181, 8
        %s183 = scalar_lea.vmem %s0, %s182
        %s184 = smul.u32 32, %s18
        %s185 = smul.u32 2, %s18
        %v186 = vld [vmem:[%s1] sm:$0x3]
        %v187 = vld [vmem:[%s183] sm:$0xff]
        %v188 = vld [vmem:[%s183 + $0x8] sm:$0xff]
        %v189 = vld [vmem:[%s183 + $0x10] sm:$0xff]
        %v190 = vld [vmem:[%s183 + $0x18] sm:$0xff]
        %v191 = vld [vmem:[%s183 + $0x20] sm:$0xff]
        %v192 = vld [vmem:[%s183 + $0x28] sm:$0xff]
        %v193 = vld [vmem:[%s183 + $0x30] sm:$0xff]
        %v194 = vld [vmem:[%s183 + $0x38] sm:$0xff]
        %v195 = vld [vmem:[%s183 + $0x40] sm:$0xff]
        %v196 = vld [vmem:[%s183 + $0x48] sm:$0xff]
        %v197 = vld [vmem:[%s183 + $0x50] sm:$0xff]
        %v198 = vld [vmem:[%s183 + $0x58] sm:$0xff]
        %v199 = vld [vmem:[%s183 + $0x60] sm:$0xff]
        %v200 = vld [vmem:[%s183 + $0x68] sm:$0xff]
        %v201 = vld [vmem:[%s183 + $0x70] sm:$0xff]
        %v202 = vld [vmem:[%s183 + $0x78] sm:$0xff]
        %v203 = vld [vmem:[%s183 + $0x80] sm:$0xff]
        %v204 = vld [vmem:[%s183 + $0x88] sm:$0xff]
        %v205 = vld [vmem:[%s183 + $0x90] sm:$0xff]
        %v206 = vld [vmem:[%s183 + $0x98] sm:$0xff]
        %v207 = vld [vmem:[%s183 + $0xa0] sm:$0xff]
        %v208 = vld [vmem:[%s183 + $0xa8] sm:$0xff]
        %v209 = vld [vmem:[%s183 + $0xb0] sm:$0xff]
        %v210 = vld [vmem:[%s183 + $0xb8] sm:$0xff]
        %v211 = vld [vmem:[%s183 + $0xc0] sm:$0xff]
        %v212 = vld [vmem:[%s183 + $0xc8] sm:$0xff]
        %v213 = vld [vmem:[%s183 + $0xd0] sm:$0xff]
        %v214 = vld [vmem:[%s183 + $0xd8] sm:$0xff]
        %v215 = vld [vmem:[%s183 + $0xe0] sm:$0xff]
        %v216 = vld [vmem:[%s183 + $0xe8] sm:$0xff]
        %v217 = vld [vmem:[%s183 + $0xf0] sm:$0xff]
        %v218 = vld [vmem:[%s183 + $0xf8] sm:$0xff]
        %vm219 = vcmask 523264
        %v221 = vsel %vm219, %v186, 0
        %v224 = vsel %vm219, %v187, 0
        %v227 = vsel %vm219, %v188, 0
        %v230 = vsel %vm219, %v189, 0
        %v233 = vsel %vm219, %v190, 0
        %v236 = vsel %vm219, %v191, 0
        %v239 = vsel %vm219, %v192, 0
        %v242 = vsel %vm219, %v193, 0
        %v245 = vsel %vm219, %v194, 0
        %v248 = vsel %vm219, %v195, 0
        %v251 = vsel %vm219, %v196, 0
        %v254 = vsel %vm219, %v197, 0
        %v257 = vsel %vm219, %v198, 0
        %v260 = vsel %vm219, %v199, 0
        %v263 = vsel %vm219, %v200, 0
        %v266 = vsel %vm219, %v201, 0
        %v269 = vsel %vm219, %v202, 0
        %v272 = vsel %vm219, %v203, 0
        %v275 = vsel %vm219, %v204, 0
        %v278 = vsel %vm219, %v205, 0
        %v281 = vsel %vm219, %v206, 0
        %v284 = vsel %vm219, %v207, 0
        %v287 = vsel %vm219, %v208, 0
        %v290 = vsel %vm219, %v209, 0
        %v293 = vsel %vm219, %v210, 0
        %v296 = vsel %vm219, %v211, 0
        %v299 = vsel %vm219, %v212, 0
        %v302 = vsel %vm219, %v213, 0
        %v305 = vsel %vm219, %v214, 0
        %v308 = vsel %vm219, %v215, 0
        %v311 = vsel %vm219, %v216, 0
        %v314 = vsel %vm219, %v217, 0
        %v317 = vsel %vm219, %v218, 0
        %319 = vmatprep.subr.mxu0 0.0
        %320 = vmatpush1.xpose.msra.mxu0 %v269
        %321 = vmatprep.subr.mxu0 0.0
        %322 = vmatpush1.xpose.msra.mxu0 %v266
        %323 = vmatprep.subr.mxu0 0.0
        %324 = vmatpush1.xpose.msra.mxu0 %v263
        %325 = vmatprep.subr.mxu0 0.0
        %326 = vmatpush1.xpose.msra.mxu0 %v260
        %327 = vmatprep.subr.mxu0 0.0
        %328 = vmatpush1.xpose.msra.mxu0 %v257
        %329 = vmatprep.subr.mxu0 0.0
        %330 = vmatpush1.xpose.msra.mxu0 %v254
        %331 = vmatprep.subr.mxu0 0.0
        %332 = vmatpush1.xpose.msra.mxu0 %v251
        %333 = vmatprep.subr.mxu0 0.0
        %334 = vmatpush1.xpose.msra.mxu0 %v248
        %335 = vmatprep.subr.mxu0 0.0
        %336 = vmatpush1.xpose.msra.mxu0 %v245
        %337 = vmatprep.subr.mxu0 0.0
        %338 = vmatpush1.xpose.msra.mxu0 %v242
        %339 = vmatprep.subr.mxu0 0.0
        %340 = vmatpush1.xpose.msra.mxu0 %v239
        %341 = vmatprep.subr.mxu0 0.0
        %342 = vmatpush1.xpose.msra.mxu0 %v236
        %343 = vmatprep.subr.mxu0 0.0
        %344 = vmatpush1.xpose.msra.mxu0 %v233
        %345 = vmatprep.subr.mxu0 0.0
        %346 = vmatpush1.xpose.msra.mxu0 %v230
        %347 = vmatprep.subr.mxu0 0.0
        %348 = vmatpush1.xpose.msra.mxu0 %v227
        %349 = vmatprep.subr.mxu0 0.0
        %350 = vmatpush1.xpose.msra.mxu0 %v224
        %351 = vmatprep.subr.mxu0 0.0
        %352 = vmatpush2.xpose.msra.mxu0 %v317
        %353 = vmatprep.subr.mxu0 0.0
        %354 = vmatpush2.xpose.msra.mxu0 %v314
        %355 = vmatprep.subr.mxu0 0.0
        %356 = vmatpush2.xpose.msra.mxu0 %v311
        %357 = vmatprep.subr.mxu0 0.0
        %358 = vmatpush2.xpose.msra.mxu0 %v308
        %359 = vmatprep.subr.mxu0 0.0
        %360 = vmatpush2.xpose.msra.mxu0 %v305
        %361 = vmatprep.subr.mxu0 0.0
        %362 = vmatpush2.xpose.msra.mxu0 %v302
        %363 = vmatprep.subr.mxu0 0.0
        %364 = vmatpush2.xpose.msra.mxu0 %v299
        %365 = vmatprep.subr.mxu0 0.0
        %366 = vmatpush2.xpose.msra.mxu0 %v296
        %367 = vmatprep.subr.mxu0 0.0
        %368 = vmatpush2.xpose.msra.mxu0 %v293
        %369 = vmatprep.subr.mxu0 0.0
        %370 = vmatpush2.xpose.msra.mxu0 %v290
        %371 = vmatprep.subr.mxu0 0.0
        %372 = vmatpush2.xpose.msra.mxu0 %v287
        %373 = vmatprep.subr.mxu0 0.0
        %374 = vmatpush2.xpose.msra.mxu0 %v284
        %375 = vmatprep.subr.mxu0 0.0
        %376 = vmatpush2.xpose.msra.mxu0 %v281
        %377 = vmatprep.subr.mxu0 0.0
        %378 = vmatpush2.xpose.msra.mxu0 %v278
        %379 = vmatprep.subr.mxu0 0.0
        %380 = vmatpush2.xpose.msra.mxu0 %v275
        %381 = vmatprep.subr.mxu0 0.0
        %382 = vmatpush2.xpose.msra.mxu0 %v272
        %383 = vmatprep.mubr.f32.mxu0 0.0
        %384 = vmatmul.mubr.f32.gmra.mxu0 %v221
        %v385 = vpop.f32.mrf.mxu0
        %v386 = vadd.f32 0.0, %v385
        %v387 = vpop.f32.mrf.mxu0
        %v388 = vadd.f32 0.0, %v387
        %389 = vdwg.mxu0
        %s390 = sld [smem:[#allocation2]]
        %v391 = vstv %s390
        %v392 = vadd.f32 %v386, %v391
        %v393 = vadd.f32 %v388, %v391
        %s394 = sld [smem:[#allocation2 + $0x1]]
        %v395 = vstv %s394
        %v396 = vadd.f32 %v386, %v395
        %v397 = vadd.f32 %v388, %v395
        %vm398 = vcmp.ge.f32.partialorder %v392, 0.0
        %vm399 = vcmp.ge.f32.partialorder %v393, 0.0
        %v400 = vmul.f32 %v392, 0.01
        %v401 = vmul.f32 %v393, 0.01
        %v402 = vsel %vm398, %v392, %v400
        %v403 = vsel %vm399, %v393, %v401
        %vm404 = vcmp.ge.f32.partialorder %v396, 0.0
        %vm405 = vcmp.ge.f32.partialorder %v397, 0.0
        %v406 = vmul.f32 %v396, 0.01
        %v407 = vmul.f32 %v397, 0.01
        %v408 = vsel %vm404, %v396, %v406
        %v409 = vsel %vm405, %v397, %v407
        %v412 = vrot.slane %v402, 7
        %v413 = vrot.slane %v403, 7
        %v416 = vsub.f32 %v408, %v412
        %v417 = vsub.f32 %v409, %v413
        %v418 = vmul.f32 %v416, 1.442695
        %v419 = vpow.pop %v418
        %v420 = vmul.f32 %v417, 1.442695
        %v421 = vpow.pop %v420
        %v422 = vadd.f32 %v419, 1.0
        %v423 = vadd.f32 %v421, 1.0
        %v424 = vrcp.pop %v422
        %v425 = vrcp.pop %v423
        %v426 = vsub.f32 1.0, %v424
        %v427 = vsub.f32 1.0, %v425
        %v430 = vrot.slane %v424, 1
        %v431 = vrot.slane %v425, 1
        %vm434 = vcmask 1040384
        %v435 = vsel %vm434, %v430, %v426
        %v436 = vsel %vm434, %v431, %v427
        %v439 = vcombine.low %v435, %v436
        %v441 = vunpack.c.l.s4 1983009808
        %v442 = vunpack.c.0.s8 %v441
        %v443 = vlaneseq
        %v444 = vshrl.u32 %v443, 7
        %v445 = vsub.s32 %v442, %v444
        %v446 = vrot.slane %v439, %v445
        %448 = vst [vmem:[%s178] sm:$0xf] %v446
        %s449 = sand.u32 %s94, 1
        %s450 = scalar_lea.sflag [#allocation3], %s449
        %s451 = sand.u32 %s94, 1
        %s452 = smul.addr %s451, 4
        %s453 = scalar_lea.vmem [#allocation5], %s452
        // Predicated region
        $region37: #{tpu_custom_call.1} parent=31 // pred_check
          %p454 = pneg %p104
        $region38: #{tpu_custom_call.1} parent=31 // pred_check_branch
          %456 = sbr.rel (%p454) target = $region40
        $region39: #{tpu_custom_call.1} parent=31 // pred_region
          %s457 = smul.u32 2, %s18
          %s459 = ssub.s32 64, 64
          %460 = vsyncadd %s450, %s459
          %s461 = smul.addr %s457, 32
          %s462 = scalar_lea.hbm %s3, %s461
          %s464 = sshll.u32 %s453, 4
          %s465 = int_to_ptr.vmem [resolvable:$true] %s464
          %467 = dma.vmem_to_hbm [thread:$0]  %s465, 64, %s462, %s450
        $region40: #{tpu_custom_call.1} parent=31 // pred_fallthru
          _
      $region32: #{tpu_custom_call.1} parent=5 // pred_fallthru
        _
      %p468 = scmp.le.s32.totalorder 2, %s13
      // Predicated region
      $region41: #{tpu_custom_call.1} parent=5 // pred_check
        %p469 = pneg %p468
      $region42: #{tpu_custom_call.1} parent=5 // pred_check_branch
        %471 = sbr.rel (%p469) target = $region44
      $region43: #{tpu_custom_call.1} parent=5 // pred_region
        %s472 = ssub.s32 %s13, 2
        // Predicated region
        $region45: #{tpu_custom_call.1} parent=43 // pred_check
          %p473 = pneg %p110
        $region46: #{tpu_custom_call.1} parent=43 // pred_check_branch
          %475 = sbr.rel (%p473) target = $region48
        $region47: #{tpu_custom_call.1} parent=43 // pred_region
          %s476 = sand.u32 %s95, 1
          %s477 = scalar_lea.sflag [#allocation3], %s476
          %s478 = sand.u32 %s95, 1
          %s479 = smul.addr %s478, 4
          %s480 = scalar_lea.vmem [#allocation5], %s479
          %481 = dma.done %s477, 64
        $region48: #{tpu_custom_call.1} parent=43 // pred_fallthru
          _
      $region44: #{tpu_custom_call.1} parent=5 // pred_fallthru
        _
    $region6: #{tpu_custom_call.1} parent=1 // loop_footer
      %s17 = sadd.s32 1, %s13
    $region7: #{tpu_custom_call.1} parent=1 // loop_footer_branch
      %12 = sbr.rel target = $region3
    $region8: #{tpu_custom_call.1} parent=1 // loop_exit
      _
    %482 = vsyncpa [#allocation3], 1
    %s483 = scalar_lea.sflag [#allocation3], 1
    %484 = vsyncpa %s483, 1
    %485 = vsyncpa [#allocation4], 1
    %s486 = scalar_lea.sflag [#allocation4], 1
    %487 = vsyncpa %s486, 1

</llo_original>
